<compile_context>
chip_gen: v7x
topology: tpu7x:2x2x1
jax: 0.10.0
libtpu: 0.0.40
codegen_flags: <defaults>
</compile_context>

<pallas_src>
import functools

import jax
import jax.numpy as jnp
from jax.experimental import pallas as pl
from jax.experimental.pallas import tpu as pltpu


def _lora_qkv_kernel(x_ref, wqkv_ref, bias_ref, a_ref, b_ref, out_ref):
    x = x_ref[...]                                           # (TM, C), bf16

    # Base qkv projection: MXU with f32 accumulation.
    qkv = jnp.dot(x, wqkv_ref[...], preferred_element_type=jnp.float32)

    # Fused LoRA: (TM, C) @ (C, 2r) -> (TM, 2r); then one (2r, 3C) matmul whose
    # block structure places new_q in cols [:C], zeros in [C:2C], new_v in
    # [2C:], so the epilogue is a single full-width add + store.
    xa = jnp.dot(x, a_ref[...], preferred_element_type=jnp.float32)
    delta = jnp.dot(xa.astype(x.dtype), b_ref[...],
                    preferred_element_type=jnp.float32)      # (TM, 3C) f32

    out_ref[...] = (qkv + bias_ref[...] + delta).astype(out_ref.dtype)


def _build_call(M_pad, C, r, tm, out_dtype, vmem_bytes, single_buffer_weights):
    def const_spec(shape):
        # Grid-invariant operand: constant index_map; request a single VMEM
        # buffer (double-buffering a weight that never changes is waste).
        if single_buffer_weights:
            return pl.BlockSpec(shape, lambda i: (0, 0),
                                pipeline_mode=pl.Buffered(1))
        return pl.BlockSpec(shape, lambda i: (0, 0))

    return pl.pallas_call(
        _lora_qkv_kernel,
        out_shape=jax.ShapeDtypeStruct((M_pad, 3 * C), out_dtype),
        grid_spec=pltpu.PrefetchScalarGridSpec(
            num_scalar_prefetch=0,
            grid=(M_pad // tm,),
            in_specs=[
                pl.BlockSpec((tm, C), lambda i: (i, 0)),     # x tile (streamed)
                const_spec((C, 3 * C)),                      # Wqkv^T (resident)
                const_spec((1, 3 * C)),                      # bias   (resident)
                const_spec((C, 2 * r)),                      # [Aq | Av]
                const_spec((2 * r, 3 * C)),                  # [Bq|0|0 ; 0|0|Bv]
            ],
            out_specs=pl.BlockSpec((tm, 3 * C), lambda i: (i, 0)),
        ),
        compiler_params=pltpu.CompilerParams(
            dimension_semantics=("parallel",),
            vmem_limit_bytes=vmem_bytes,
        ),
    )


def lora_qkv(x, wqkv_t, bias, aq_t, bq_t, av_t, bv_t, *, tm=256,
             compute_dtype=jnp.bfloat16):
    """x: (B, H, W, C). Weights pre-transposed for right-multiplication:
    wqkv_t (C, 3C), aq_t/av_t (C, r), bq_t/bv_t (r, C).
    Returns (B, H, W, 3C) in x.dtype."""
    B, H, W, C = x.shape
    r = aq_t.shape[1]
    M = B * H * W
    out_dtype = x.dtype

    # bf16 operands (MXU native on all generations); f32 accumulate in-kernel.
    x2d = x.reshape(M, C).astype(compute_dtype)
    wqkv = wqkv_t.astype(compute_dtype)
    bias2d = bias.reshape(1, 3 * C).astype(jnp.float32)

    # Fuse LoRA branches: A_fused = [Aq | Av] (C, 2r).
    # B_fused (2r, 3C): rows [:r] carry Bq into cols [:C], rows [r:] carry Bv
    # into cols [2C:]; middle C columns stay zero (k stays LoRA-free).
    a_fused = jnp.concatenate([aq_t, av_t], axis=1).astype(compute_dtype)
    b_fused = jnp.zeros((2 * r, 3 * C), compute_dtype)
    b_fused = b_fused.at[:r, :C].set(bq_t.astype(compute_dtype))
    b_fused = b_fused.at[r:, 2 * C:].set(bv_t.astype(compute_dtype))

    # Row tile: as large as possible but never larger than M; pad M up to a
    # multiple of the tile so the grid divides evenly.
    tm_eff = min(tm, M)
    if tm_eff % 8 != 0 and tm_eff != M:
        tm_eff = max(8, (tm_eff // 8) * 8)
    n_tiles = pl.cdiv(M, tm_eff)
    M_pad = n_tiles * tm_eff
    if M_pad != M:
        x2d = jnp.pad(x2d, ((0, M_pad - M), (0, 0)))

    # Explicit VMEM budget: resident weights (x2 in case single-buffering is
    # unavailable) + double-buffered x / out tiles, with headroom. Clamped so
    # we stay inside v7x's 64 MiB physical VMEM with margin.
    bpe = jnp.dtype(compute_dtype).itemsize
    weight_bytes = (C * 3 * C + C * 2 * r + 2 * r * 3 * C) * bpe + 3 * C * 4
    tile_bytes = (tm_eff * C * bpe
                  + tm_eff * 3 * C * jnp.dtype(out_dtype).itemsize)
    vmem_bytes = int(1.5 * (2 * weight_bytes + 2 * tile_bytes)) + (2 << 20)
    vmem_bytes = min(max(vmem_bytes, 16 * 1024 * 1024), 56 * 1024 * 1024)

    args = (x2d, wqkv, bias2d, a_fused, b_fused)
    try:
        out2d = _build_call(M_pad, C, r, tm_eff, out_dtype, vmem_bytes,
                            single_buffer_weights=True)(*args)
        out2d = jax.block_until_ready(out2d)
    except Exception:
        # Fallback for jax/libtpu builds without BlockSpec pipeline_mode
        # support: default (double-buffered) weight specs.
        out2d = _build_call(M_pad, C, r, tm_eff, out_dtype, vmem_bytes,
                            single_buffer_weights=False)(*args)

    return out2d[:M].reshape(B, H, W, 3 * C)


def _reference(x, wqkv_t, bias, aq_t, bq_t, av_t, bv_t):
    B, H, W, C = x.shape
    qkv = jnp.einsum("bhwc,cd->bhwd", x, wqkv_t) + bias
    new_q = jnp.einsum("bhwc,cd->bhwd",
                       jnp.einsum("bhwc,cr->bhwr", x, aq_t), bq_t)
    new_v = jnp.einsum("bhwc,cd->bhwd",
                       jnp.einsum("bhwc,cr->bhwr", x, av_t), bv_t)
    qkv = qkv.at[..., :C].add(new_q)
    qkv = qkv.at[..., -C:].add(new_v)
    return qkv


if __name__ == "__main__":
    key = jax.random.PRNGKey(0)
    B, H, W, C = 2, 4, 4, 32          # dim = 32 (small debug shape)
    r = 8                              # LoRA rank

    ks = jax.random.split(key, 7)
    x = jax.random.normal(ks[0], (B, H, W, C), dtype=jnp.float32)

    # PyTorch Linear stores weight as (out, in); transpose once for the
    # right-multiply layout the kernel expects.
    w_qkv = jax.random.normal(ks[1], (3 * C, C), dtype=jnp.float32) * 0.05
    b_qkv = jax.random.normal(ks[2], (3 * C,), dtype=jnp.float32) * 0.05
    w_aq = jax.random.normal(ks[3], (r, C), dtype=jnp.float32) * 0.05
    w_bq = jax.random.normal(ks[4], (C, r), dtype=jnp.float32) * 0.05
    w_av = jax.random.normal(ks[5], (r, C), dtype=jnp.float32) * 0.05
    w_bv = jax.random.normal(ks[6], (C, r), dtype=jnp.float32) * 0.05

    out = lora_qkv(x, w_qkv.T, b_qkv, w_aq.T, w_bq.T, w_av.T, w_bv.T)
    out = jax.block_until_ready(out)

    # Reference: same math with inputs rounded to the kernel's compute dtype
    # (bf16) so the check isolates kernel correctness from input quantization.
    rt = lambda a: a.astype(jnp.bfloat16).astype(jnp.float32)
    ref = _reference(rt(x), rt(w_qkv.T), b_qkv, rt(w_aq.T), rt(w_bq.T),
                     rt(w_av.T), rt(w_bv.T))

    assert out.shape == (B, H, W, 3 * C)
    assert jnp.allclose(out.astype(jnp.float32), ref, atol=5e-3, rtol=5e-3), \
        "mismatch vs reference"

    print("KERNEL_OK")
</pallas_src>

<mosaic_0001>
module attributes {stable_mosaic.version = 11 : i64} {
  func.func @_lora_qkv_kernel(%arg0: i32, %arg1: memref<32x32xbf16, #tpu.memory_space<vmem>>, %arg2: memref<32x96xbf16, #tpu.memory_space<vmem>>, %arg3: memref<1x96xf32, #tpu.memory_space<vmem>>, %arg4: memref<32x16xbf16, #tpu.memory_space<vmem>>, %arg5: memref<16x96xbf16, #tpu.memory_space<vmem>>, %arg6: memref<32x96xf32, #tpu.memory_space<vmem>>) attributes {dimension_semantics = [#tpu.dimension_semantics<parallel>], iteration_bounds = array<i64: 1>, scalar_prefetch = 0 : i64, scratch_operands = 0 : i64, tpu.core_type = #tpu.core_type<tc>, window_params = [{transform_indices = @transform_0, window_bounds = array<i64: 32, 32>}, {pipeline_mode = #tpu.pipeline_mode<synchronous>, transform_indices = @transform_1, window_bounds = array<i64: 32, 96>}, {pipeline_mode = #tpu.pipeline_mode<synchronous>, transform_indices = @transform_2, window_bounds = array<i64: 1, 96>}, {pipeline_mode = #tpu.pipeline_mode<synchronous>, transform_indices = @transform_3, window_bounds = array<i64: 32, 16>}, {pipeline_mode = #tpu.pipeline_mode<synchronous>, transform_indices = @transform_4, window_bounds = array<i64: 16, 96>}, {transform_indices = @transform_5, window_bounds = array<i64: 32, 96>}]} {
    %c0 = arith.constant 0 : index
    %c0_0 = arith.constant 0 : index
    %0 = vector.load %arg1[%c0, %c0_0] : memref<32x32xbf16, #tpu.memory_space<vmem>>, vector<32x32xbf16>
    %c0_1 = arith.constant 0 : index
    %c0_2 = arith.constant 0 : index
    %1 = vector.load %arg2[%c0_1, %c0_2] : memref<32x96xbf16, #tpu.memory_space<vmem>>, vector<32x96xbf16>
    %cst = arith.constant dense<0.000000e+00> : vector<32x96xf32>
    %2 = tpu.matmul %0, %1, %cst {dimension_numbers = #tpu.dot_dimension_numbers<[1], [0], [0], [1], [0, 0, 1, 1], [], []>} : vector<32x32xbf16>, vector<32x96xbf16>, vector<32x96xf32> -> vector<32x96xf32>
    %c0_3 = arith.constant 0 : index
    %c0_4 = arith.constant 0 : index
    %3 = vector.load %arg4[%c0_3, %c0_4] : memref<32x16xbf16, #tpu.memory_space<vmem>>, vector<32x16xbf16>
    %cst_5 = arith.constant dense<0.000000e+00> : vector<32x16xf32>
    %4 = tpu.matmul %0, %3, %cst_5 {dimension_numbers = #tpu.dot_dimension_numbers<[1], [0], [0], [1], [0, 0, 1, 1], [], []>} : vector<32x32xbf16>, vector<32x16xbf16>, vector<32x16xf32> -> vector<32x16xf32>
    %5 = arith.truncf %4 : vector<32x16xf32> to vector<32x16xbf16>
    %c0_6 = arith.constant 0 : index
    %c0_7 = arith.constant 0 : index
    %6 = vector.load %arg5[%c0_6, %c0_7] : memref<16x96xbf16, #tpu.memory_space<vmem>>, vector<16x96xbf16>
    %cst_8 = arith.constant dense<0.000000e+00> : vector<32x96xf32>
    %7 = tpu.matmul %5, %6, %cst_8 {dimension_numbers = #tpu.dot_dimension_numbers<[1], [0], [0], [1], [0, 0, 1, 1], [], []>} : vector<32x16xbf16>, vector<16x96xbf16>, vector<32x96xf32> -> vector<32x96xf32>
    %c0_9 = arith.constant 0 : index
    %c0_10 = arith.constant 0 : index
    %8 = vector.load %arg3[%c0_9, %c0_10] : memref<1x96xf32, #tpu.memory_space<vmem>>, vector<1x96xf32>
    %9 = vector.broadcast %8 : vector<1x96xf32> to vector<32x96xf32>
    %10 = arith.addf %2, %9 : vector<32x96xf32>
    %11 = arith.addf %10, %7 : vector<32x96xf32>
    %c0_11 = arith.constant 0 : index
    %c0_12 = arith.constant 0 : index
    %12 = vector.load %arg6[%c0_11, %c0_12] : memref<32x96xf32, #tpu.memory_space<vmem>>, vector<32x96xf32>
    tpu.vector_store %arg6[%c0_11, %c0_12], %11 {strides = array<i32>} : memref<32x96xf32, #tpu.memory_space<vmem>>, vector<32x96xf32>,
    return
  }
  func.func @transform_0(%arg0: i32) -> (i32, i32) {
    %c0_i32 = arith.constant 0 : i32
    %c0_i32_0 = arith.constant 0 : i32
    return %arg0, %c0_i32 : i32, i32
  }
  func.func @transform_1(%arg0: i32) -> (i32, i32) {
    %c0_i32 = arith.constant 0 : i32
    %c0_i32_0 = arith.constant 0 : i32
    %c0_i32_1 = arith.constant 0 : i32
    return %c0_i32, %c0_i32_0 : i32, i32
  }
  func.func @transform_2(%arg0: i32) -> (i32, i32) {
    %c0_i32 = arith.constant 0 : i32
    %c0_i32_0 = arith.constant 0 : i32
    %c0_i32_1 = arith.constant 0 : i32
    return %c0_i32, %c0_i32_0 : i32, i32
  }
  func.func @transform_3(%arg0: i32) -> (i32, i32) {
    %c0_i32 = arith.constant 0 : i32
    %c0_i32_0 = arith.constant 0 : i32
    %c0_i32_1 = arith.constant 0 : i32
    return %c0_i32, %c0_i32_0 : i32, i32
  }
  func.func @transform_4(%arg0: i32) -> (i32, i32) {
    %c0_i32 = arith.constant 0 : i32
    %c0_i32_0 = arith.constant 0 : i32
    %c0_i32_1 = arith.constant 0 : i32
    return %c0_i32, %c0_i32_0 : i32, i32
  }
  func.func @transform_5(%arg0: i32) -> (i32, i32) {
    %c0_i32 = arith.constant 0 : i32
    %c0_i32_0 = arith.constant 0 : i32
    return %arg0, %c0_i32 : i32, i32
  }
}

module attributes {stable_mosaic.version = 11 : i64} {
  func.func @_lora_qkv_kernel(%arg0: i32, %arg1: memref<32x32xbf16, #tpu.memory_space<vmem>>, %arg2: memref<32x96xbf16, #tpu.memory_space<vmem>>, %arg3: memref<1x96xf32, #tpu.memory_space<vmem>>, %arg4: memref<32x16xbf16, #tpu.memory_space<vmem>>, %arg5: memref<16x96xbf16, #tpu.memory_space<vmem>>, %arg6: memref<32x96xf32, #tpu.memory_space<vmem>>) attributes {dimension_semantics = [#tpu.dimension_semantics<parallel>], iteration_bounds = array<i64: 1>, scalar_prefetch = 0 : i64, scratch_operands = 0 : i64, tpu.core_type = #tpu.core_type<tc>, window_params = [{transform_indices = @transform_0, window_bounds = array<i64: 32, 32>}, {pipeline_mode = #tpu.pipeline_mode<synchronous>, transform_indices = @transform_1, window_bounds = array<i64: 32, 96>}, {pipeline_mode = #tpu.pipeline_mode<synchronous>, transform_indices = @transform_2, window_bounds = array<i64: 1, 96>}, {pipeline_mode = #tpu.pipeline_mode<synchronous>, transform_indices = @transform_3, window_bounds = array<i64: 32, 16>}, {pipeline_mode = #tpu.pipeline_mode<synchronous>, transform_indices = @transform_4, window_bounds = array<i64: 16, 96>}, {transform_indices = @transform_5, window_bounds = array<i64: 32, 96>}]} {
    %c0 = arith.constant 0 : index
    %c0_0 = arith.constant 0 : index
    %0 = vector.load %arg1[%c0, %c0_0] : memref<32x32xbf16, #tpu.memory_space<vmem>>, vector<32x32xbf16>
    %c0_1 = arith.constant 0 : index
    %c0_2 = arith.constant 0 : index
    %1 = vector.load %arg2[%c0_1, %c0_2] : memref<32x96xbf16, #tpu.memory_space<vmem>>, vector<32x96xbf16>
    %cst = arith.constant dense<0.000000e+00> : vector<32x96xf32>
    %2 = tpu.matmul %0, %1, %cst {dimension_numbers = #tpu.dot_dimension_numbers<[1], [0], [0], [1], [0, 0, 1, 1], [], []>} : vector<32x32xbf16>, vector<32x96xbf16>, vector<32x96xf32> -> vector<32x96xf32>
    %c0_3 = arith.constant 0 : index
    %c0_4 = arith.constant 0 : index
    %3 = vector.load %arg4[%c0_3, %c0_4] : memref<32x16xbf16, #tpu.memory_space<vmem>>, vector<32x16xbf16>
    %cst_5 = arith.constant dense<0.000000e+00> : vector<32x16xf32>
    %4 = tpu.matmul %0, %3, %cst_5 {dimension_numbers = #tpu.dot_dimension_numbers<[1], [0], [0], [1], [0, 0, 1, 1], [], []>} : vector<32x32xbf16>, vector<32x16xbf16>, vector<32x16xf32> -> vector<32x16xf32>
    %5 = arith.truncf %4 : vector<32x16xf32> to vector<32x16xbf16>
    %c0_6 = arith.constant 0 : index
    %c0_7 = arith.constant 0 : index
    %6 = vector.load %arg5[%c0_6, %c0_7] : memref<16x96xbf16, #tpu.memory_space<vmem>>, vector<16x96xbf16>
    %cst_8 = arith.constant dense<0.000000e+00> : vector<32x96xf32>
    %7 = tpu.matmul %5, %6, %cst_8 {dimension_numbers = #tpu.dot_dimension_numbers<[1], [0], [0], [1], [0, 0, 1, 1], [], []>} : vector<32x16xbf16>, vector<16x96xbf16>, vector<32x96xf32> -> vector<32x96xf32>
    %c0_9 = arith.constant 0 : index
    %c0_10 = arith.constant 0 : index
    %8 = vector.load %arg3[%c0_9, %c0_10] : memref<1x96xf32, #tpu.memory_space<vmem>>, vector<1x96xf32>
    %9 = vector.broadcast %8 : vector<1x96xf32> to vector<32x96xf32>
    %10 = arith.addf %2, %9 : vector<32x96xf32>
    %11 = arith.addf %10, %7 : vector<32x96xf32>
    %c0_11 = arith.constant 0 : index
    %c0_12 = arith.constant 0 : index
    %12 = vector.load %arg6[%c0_11, %c0_12] : memref<32x96xf32, #tpu.memory_space<vmem>>, vector<32x96xf32>
    tpu.vector_store %arg6[%c0_11, %c0_12], %11 {strides = array<i32>} : memref<32x96xf32, #tpu.memory_space<vmem>>, vector<32x96xf32>,
    return
  }
  func.func @transform_0(%arg0: i32) -> (i32, i32) {
    %c0_i32 = arith.constant 0 : i32
    %c0_i32_0 = arith.constant 0 : i32
    return %arg0, %c0_i32 : i32, i32
  }
  func.func @transform_1(%arg0: i32) -> (i32, i32) {
    %c0_i32 = arith.constant 0 : i32
    %c0_i32_0 = arith.constant 0 : i32
    %c0_i32_1 = arith.constant 0 : i32
    return %c0_i32, %c0_i32_0 : i32, i32
  }
  func.func @transform_2(%arg0: i32) -> (i32, i32) {
    %c0_i32 = arith.constant 0 : i32
    %c0_i32_0 = arith.constant 0 : i32
    %c0_i32_1 = arith.constant 0 : i32
    return %c0_i32, %c0_i32_0 : i32, i32
  }
  func.func @transform_3(%arg0: i32) -> (i32, i32) {
    %c0_i32 = arith.constant 0 : i32
    %c0_i32_0 = arith.constant 0 : i32
    %c0_i32_1 = arith.constant 0 : i32
    return %c0_i32, %c0_i32_0 : i32, i32
  }
  func.func @transform_4(%arg0: i32) -> (i32, i32) {
    %c0_i32 = arith.constant 0 : i32
    %c0_i32_0 = arith.constant 0 : i32
    %c0_i32_1 = arith.constant 0 : i32
    return %c0_i32, %c0_i32_0 : i32, i32
  }
  func.func @transform_5(%arg0: i32) -> (i32, i32) {
    %c0_i32 = arith.constant 0 : i32
    %c0_i32_0 = arith.constant 0 : i32
    return %arg0, %c0_i32 : i32, i32
  }
}

</mosaic_0001>

<llo_original>
// kernel: tpu_custom_call.1
$region0: #{tpu_custom_call.1}
  #allocation0 [shape = 'u32[]', space=smem, size = 0x4, offset = 0x4, fixed_abs, tag = 'smem constant byte address 0x4 - core index']
  #allocation1 [shape = 'u32[144,128]{1,0:T(1,128)}', space=vmem, size = 0x12000, scoped, tag = 'internal scratch']
  %s0 = inlined_call_operand.vmem [shape: bf16[32,32], index: 0, kind: input, shape index: {}]
  %s1 = inlined_call_operand.hbm [shape: bf16[32,96], index: 1, kind: input, shape index: {}]
  %s2 = inlined_call_operand.vmem [shape: f32[1,96], index: 2, kind: input, shape index: {}]
  %s3 = inlined_call_operand.vmem [shape: bf16[32,16], index: 3, kind: input, shape index: {}]
  %s4 = inlined_call_operand.vmem [shape: bf16[16,96], index: 4, kind: input, shape index: {}]
  %s5 = inlined_call_operand.hbm [shape: f32[32,96], index: 5, kind: output, shape index: {}]
  %s6 = sld [smem:[#allocation0]]
  $region34: #{tpu_custom_call.1} parent=0
    _
  %s8 = ssub.s32 1, %s6
  %s9 = scalar_select 0, %s8, %s6
  $region1: #{tpu_custom_call.1} parent=0
    #allocation2 [shape = 'u8[8192]{0}', space=vmem, size = 0x2000, scoped, tag = 'input window, operand 1, single buffered']
    #allocation3 [shape = 's32[1]{0}', space=sflag, size = 0x4, scoped, tag = 'scoped memory for tpu_custom_call.1']
    #allocation4 [shape = 's32[1]{0}', space=sflag, size = 0x4, scoped, tag = 'scoped memory for tpu_custom_call.1']
    #allocation5 [shape = 'u8[16384]{0}', space=vmem, size = 0x4000, scoped, tag = 'output window, operand 0, single buffered']
    %10 = vsyncpa [#allocation3], 0
    %11 = vsyncpa [#allocation4], 0
    // Predicated region
    $region2: #{tpu_custom_call.1} parent=1 // pred_check
      _
    $region3: #{tpu_custom_call.1} parent=1 // pred_check_branch
      %13 = sbr.rel (0) target = $region5
    $region4: #{tpu_custom_call.1} parent=1 // pred_region
      _
    $region5: #{tpu_custom_call.1} parent=1 // pred_fallthru
      _
    // Predicated region
    $region6: #{tpu_custom_call.1} parent=1 // pred_check
      _
    $region7: #{tpu_custom_call.1} parent=1 // pred_check_branch
      %15 = sbr.rel (0) target = $region9
    $region8: #{tpu_custom_call.1} parent=1 // pred_region
      %s17 = ssub.s32 256, 256
      %18 = vsyncadd [#allocation3], %s17
      %s19 = sshll.u32 [#allocation2], 4
      %s20 = int_to_ptr.vmem [resolvable:$true] %s19
      %25 = dma.hbm_to_vmem [thread:$0]  %s1, 256, %s20, [#allocation3], 64, 64, 4
    $region9: #{tpu_custom_call.1} parent=1 // pred_fallthru
      _
    // Predicated region
    $region10: #{tpu_custom_call.1} parent=1 // pred_check
      _
    $region11: #{tpu_custom_call.1} parent=1 // pred_check_branch
      %27 = sbr.rel (0) target = $region13
    $region12: #{tpu_custom_call.1} parent=1 // pred_region
      _
    $region13: #{tpu_custom_call.1} parent=1 // pred_fallthru
      _
    // Predicated region
    $region14: #{tpu_custom_call.1} parent=1 // pred_check
      _
    $region15: #{tpu_custom_call.1} parent=1 // pred_check_branch
      %29 = sbr.rel (0) target = $region17
    $region16: #{tpu_custom_call.1} parent=1 // pred_region
      _
    $region17: #{tpu_custom_call.1} parent=1 // pred_fallthru
      _
    // Predicated region
    $region18: #{tpu_custom_call.1} parent=1 // pred_check
      _
    $region19: #{tpu_custom_call.1} parent=1 // pred_check_branch
      %31 = sbr.rel (0) target = $region21
    $region20: #{tpu_custom_call.1} parent=1 // pred_region
      _
    $region21: #{tpu_custom_call.1} parent=1 // pred_fallthru
      _
    // Predicated region
    $region22: #{tpu_custom_call.1} parent=1 // pred_check
      _
    $region23: #{tpu_custom_call.1} parent=1 // pred_check_branch
      %33 = sbr.rel (0) target = $region25
    $region24: #{tpu_custom_call.1} parent=1 // pred_region
      %34 = dma.done [#allocation3], 256
    $region25: #{tpu_custom_call.1} parent=1 // pred_fallthru
      _
    %v36 = vld [vmem:[%s0] sm:$0xf]
    %v37 = vld [vmem:[%s0 + $0x4] sm:$0xf]
    %v38 = vld [vmem:[%s0 + $0x8] sm:$0xf]
    %v39 = vld [vmem:[%s0 + $0xc] sm:$0xf]
    %v40 = vld [vmem:[#allocation2] sm:$0xf]
    %v41 = vld [vmem:[#allocation2 + $0x4] sm:$0xf]
    %v42 = vld [vmem:[#allocation2 + $0x8] sm:$0xf]
    %v43 = vld [vmem:[#allocation2 + $0xc] sm:$0xf]
    %v44 = vld [vmem:[%s3] sm:$0xf]
    %v45 = vld [vmem:[%s3 + $0x4] sm:$0xf]
    %v46 = vld [vmem:[%s3 + $0x8] sm:$0xf]
    %v47 = vld [vmem:[%s3 + $0xc] sm:$0xf]
    %v52 = vunpack.c.l.b16 %v36
    %v53 = vunpack.c.l.b16 %v37
    %v54 = vunpack.c.l.b16 %v38
    %v55 = vunpack.c.l.b16 %v39
    %v56 = vpack.c.b16 %v53, %v52
    %v57 = vpack.c.b16 %v55, %v54
    %v62 = vunpack.c.l.b16 %v44
    %v63 = vunpack.c.l.b16 %v45
    %v64 = vunpack.c.l.b16 %v46
    %v65 = vunpack.c.l.b16 %v47
    %v66 = vpack.c.b16 %v63, %v62
    %v67 = vpack.c.b16 %v65, %v64
    %vm70 = vcmask 261120
    %v72 = vsel %vm70, %v56, 0
    %v75 = vsel %vm70, %v57, 0
    %77 = vmatprep.subr.bf16.mxu0 0
    %78 = vmatpush1.bf16.msra.mxu0 %v66
    %79 = vmatprep.subr.bf16.mxu0 0
    %80 = vmatpush1.bf16.msra.mxu0 %v67
    %81 = vmatprep.subr.bf16.mxu0 0
    %82 = vmatpush1.bf16.msra.mxu0 0
    %83 = vmatprep.subr.bf16.mxu0 0
    %84 = vmatpush1.bf16.msra.mxu0 0
    %85 = vmatprep.subr.bf16.mxu0 0
    %86 = vmatpush1.bf16.msra.mxu0 0
    %87 = vmatprep.subr.bf16.mxu0 0
    %88 = vmatpush1.bf16.msra.mxu0 0
    %89 = vmatprep.subr.bf16.mxu0 0
    %90 = vmatpush1.bf16.msra.mxu0 0
    %91 = vmatprep.subr.bf16.mxu0 0
    %92 = vmatpush1.bf16.msra.mxu0 0
    %93 = vmatprep.subr.bf16.mxu0 0
    %94 = vmatpush1.bf16.msra.mxu0 0
    %95 = vmatprep.subr.bf16.mxu0 0
    %96 = vmatpush1.bf16.msra.mxu0 0
    %97 = vmatprep.subr.bf16.mxu0 0
    %98 = vmatpush1.bf16.msra.mxu0 0
    %99 = vmatprep.subr.bf16.mxu0 0
    %100 = vmatpush1.bf16.msra.mxu0 0
    %101 = vmatprep.subr.bf16.mxu0 0
    %102 = vmatpush1.bf16.msra.mxu0 0
    %103 = vmatprep.subr.bf16.mxu0 0
    %104 = vmatpush1.bf16.msra.mxu0 0
    %105 = vmatprep.subr.bf16.mxu0 0
    %106 = vmatpush1.bf16.msra.mxu0 0
    %107 = vmatprep.subr.bf16.mxu0 0
    %108 = vmatpush1.bf16.msra.mxu0 0
    %109 = vmatprep.mubr.bf16.mxu0 0
    %110 = vmatmul.mubr.bf16.gmra.mrb[0].mxu0 %v72
    %v111 = vpop.f32.mrb[0].mxu0
    %v112 = vadd.f32 0.0, %v111
    %v113 = vpop.f32.mrb[0].mxu0
    %v114 = vpop.f32.mrb[0].mxu0
    %v115 = vadd.f32 0.0, %v114
    %v116 = vpop.f32.mrb[0].mxu0
    %117 = vmatprep.mubr.bf16.mxu0 0
    %118 = vmatmul.mubr.bf16.gmra.mrb[0].mxu0 %v75
    %v119 = vpop.f32.mrb[0].mxu0
    %v120 = vadd.f32 0.0, %v119
    %v121 = vpop.f32.mrb[0].mxu0
    %v122 = vpop.f32.mrb[0].mxu0
    %v123 = vadd.f32 0.0, %v122
    %v124 = vpop.f32.mrb[0].mxu0
    %125 = vdwg.mxu0
    %v126 = vpack.c.bf16 %v115, %v112
    %v127 = vpack.c.bf16 %v123, %v120
    %v128 = vld [vmem:[%s4] sm:$0xf]
    %v129 = vld [vmem:[%s4 + $0x4] sm:$0xf]
    %v132 = vunpack.c.l.b16 %v128
    %v133 = vunpack.c.l.b16 %v129
    %v134 = vpack.c.b16 %v133, %v132
    %vm136 = vcmask 130048
    %v138 = vsel %vm136, %v126, 0
    %v141 = vsel %vm136, %v127, 0
    %143 = vmatprep.subr.bf16.mxu0 0
    %144 = vmatpush1.bf16.msra.mxu0 %v134
    %145 = vmatprep.subr.bf16.mxu0 0
    %146 = vmatpush1.bf16.msra.mxu0 0
    %147 = vmatprep.subr.bf16.mxu0 0
    %148 = vmatpush1.bf16.msra.mxu0 0
    %149 = vmatprep.subr.bf16.mxu0 0
    %150 = vmatpush1.bf16.msra.mxu0 0
    %151 = vmatprep.subr.bf16.mxu0 0
    %152 = vmatpush1.bf16.msra.mxu0 0
    %153 = vmatprep.subr.bf16.mxu0 0
    %154 = vmatpush1.bf16.msra.mxu0 0
    %155 = vmatprep.subr.bf16.mxu0 0
    %156 = vmatpush1.bf16.msra.mxu0 0
    %157 = vmatprep.subr.bf16.mxu0 0
    %158 = vmatpush1.bf16.msra.mxu0 0
    %159 = vmatprep.subr.bf16.mxu0 0
    %160 = vmatpush1.bf16.msra.mxu0 0
    %161 = vmatprep.subr.bf16.mxu0 0
    %162 = vmatpush1.bf16.msra.mxu0 0
    %163 = vmatprep.subr.bf16.mxu0 0
    %164 = vmatpush1.bf16.msra.mxu0 0
    %165 = vmatprep.subr.bf16.mxu0 0
    %166 = vmatpush1.bf16.msra.mxu0 0
    %167 = vmatprep.subr.bf16.mxu0 0
    %168 = vmatpush1.bf16.msra.mxu0 0
    %169 = vmatprep.subr.bf16.mxu0 0
    %170 = vmatpush1.bf16.msra.mxu0 0
    %171 = vmatprep.subr.bf16.mxu0 0
    %172 = vmatpush1.bf16.msra.mxu0 0
    %173 = vmatprep.subr.bf16.mxu0 0
    %174 = vmatpush1.bf16.msra.mxu0 0
    %175 = vmatprep.mubr.bf16.mxu0 0
    %176 = vmatmul.mubr.bf16.gmra.mrb[0].mxu0 %v138
    %v177 = vpop.f32.mrb[0].mxu0
    %v178 = vadd.f32 0.0, %v177
    %v179 = vpop.f32.mrb[0].mxu0
    %v180 = vpop.f32.mrb[0].mxu0
    %v181 = vadd.f32 0.0, %v180
    %v182 = vpop.f32.mrb[0].mxu0
    %183 = vmatprep.mubr.bf16.mxu0 0
    %184 = vmatmul.mubr.bf16.gmra.mrb[0].mxu0 %v141
    %v185 = vpop.f32.mrb[0].mxu0
    %v186 = vadd.f32 0.0, %v185
    %v187 = vpop.f32.mrb[0].mxu0
    %v188 = vpop.f32.mrb[0].mxu0
    %v189 = vadd.f32 0.0, %v188
    %v190 = vpop.f32.mrb[0].mxu0
    %191 = vdwg.mxu0
    %v192 = vld [vmem:[%s2] sm:$0x1]
    %v194 = vlaneseq
    %v195 = vshrl.u32 %v194, 7
    %v196 = vsub.s32 0, %v195
    %v197 = vrot.slane %v192, %v196
    %v203 = vunpack.c.l.b16 %v40
    %v204 = vunpack.c.l.b16 %v41
    %v205 = vunpack.c.l.b16 %v42
    %v206 = vunpack.c.l.b16 %v43
    %v207 = vpack.c.b16 %v204, %v203
    %v208 = vpack.c.b16 %v206, %v205
    %211 = vmatprep.subr.bf16.mxu0 0
    %212 = vmatpush1.bf16.msra.mxu0 %v207
    %213 = vmatprep.subr.bf16.mxu0 0
    %214 = vmatpush1.bf16.msra.mxu0 %v208
    %215 = vmatprep.subr.bf16.mxu0 0
    %216 = vmatpush1.bf16.msra.mxu0 0
    %217 = vmatprep.subr.bf16.mxu0 0
    %218 = vmatpush1.bf16.msra.mxu0 0
    %219 = vmatprep.subr.bf16.mxu0 0
    %220 = vmatpush1.bf16.msra.mxu0 0
    %221 = vmatprep.subr.bf16.mxu0 0
    %222 = vmatpush1.bf16.msra.mxu0 0
    %223 = vmatprep.subr.bf16.mxu0 0
    %224 = vmatpush1.bf16.msra.mxu0 0
    %225 = vmatprep.subr.bf16.mxu0 0
    %226 = vmatpush1.bf16.msra.mxu0 0
    %227 = vmatprep.subr.bf16.mxu0 0
    %228 = vmatpush1.bf16.msra.mxu0 0
    %229 = vmatprep.subr.bf16.mxu0 0
    %230 = vmatpush1.bf16.msra.mxu0 0
    %231 = vmatprep.subr.bf16.mxu0 0
    %232 = vmatpush1.bf16.msra.mxu0 0
    %233 = vmatprep.subr.bf16.mxu0 0
    %234 = vmatpush1.bf16.msra.mxu0 0
    %235 = vmatprep.subr.bf16.mxu0 0
    %236 = vmatpush1.bf16.msra.mxu0 0
    %237 = vmatprep.subr.bf16.mxu0 0
    %238 = vmatpush1.bf16.msra.mxu0 0
    %239 = vmatprep.subr.bf16.mxu0 0
    %240 = vmatpush1.bf16.msra.mxu0 0
    %241 = vmatprep.subr.bf16.mxu0 0
    %242 = vmatpush1.bf16.msra.mxu0 0
    %243 = vmatprep.mubr.bf16.mxu0 0
    %244 = vmatmul.mubr.bf16.gmra.mrb[0].mxu0 %v72
    %v245 = vpop.f32.mrb[0].mxu0
    %v246 = vadd.f32 %v197, %v245
    %v247 = vpop.f32.mrb[0].mxu0
    %v248 = vpop.f32.mrb[0].mxu0
    %v249 = vadd.f32 %v197, %v248
    %v250 = vpop.f32.mrb[0].mxu0
    %251 = vmatprep.mubr.bf16.mxu0 0
    %252 = vmatmul.mubr.bf16.gmra.mrb[0].mxu0 %v75
    %v253 = vpop.f32.mrb[0].mxu0
    %v254 = vadd.f32 %v197, %v253
    %v255 = vpop.f32.mrb[0].mxu0
    %v256 = vpop.f32.mrb[0].mxu0
    %v257 = vadd.f32 %v197, %v256
    %v258 = vpop.f32.mrb[0].mxu0
    %259 = vdwg.mxu0
    %v260 = vadd.f32 %v246, %v178
    %v261 = vadd.f32 %v249, %v181
    %v262 = vadd.f32 %v254, %v186
    %v263 = vadd.f32 %v257, %v189
    %vm264 = vcmask 785408
    %265 = vst.msk [vmem:[#allocation5] sm:$0xff] %vm264, %v260
    %266 = vst.msk [vmem:[#allocation5 + $0x8] sm:$0xff] %vm264, %v261
    %267 = vst.msk [vmem:[#allocation5 + $0x10] sm:$0xff] %vm264, %v262
    %268 = vst.msk [vmem:[#allocation5 + $0x18] sm:$0xff] %vm264, %v263
    // Predicated region
    $region26: #{tpu_custom_call.1} parent=1 // pred_check
      _
    $region27: #{tpu_custom_call.1} parent=1 // pred_check_branch
      %270 = sbr.rel (0) target = $region29
    $region28: #{tpu_custom_call.1} parent=1 // pred_region
      %s272 = ssub.s32 512, 512
      %273 = vsyncadd [#allocation4], %s272
      %s274 = sshll.u32 [#allocation5], 4
      %s275 = int_to_ptr.vmem [resolvable:$true] %s274
      %280 = dma.vmem_to_hbm [thread:$0]  %s275, 512, %s5, [#allocation4], 128, 128, 8
    $region29: #{tpu_custom_call.1} parent=1 // pred_fallthru
      _
    // Predicated region
    $region30: #{tpu_custom_call.1} parent=1 // pred_check
      _
    $region31: #{tpu_custom_call.1} parent=1 // pred_check_branch
      %282 = sbr.rel (0) target = $region33
    $region32: #{tpu_custom_call.1} parent=1 // pred_region
      %283 = dma.done [#allocation4], 512
    $region33: #{tpu_custom_call.1} parent=1 // pred_fallthru
      _
    %284 = vsyncpa [#allocation3], 1
    %285 = vsyncpa [#allocation4], 1

// kernel: tpu_custom_call.1
$region0: #{tpu_custom_call.1}
  #allocation0 [shape = 'u32[]', space=smem, size = 0x4, offset = 0x4, fixed_abs, tag = 'smem constant byte address 0x4 - core index']
  #allocation1 [shape = 'u32[144,128]{1,0:T(1,128)}', space=vmem, size = 0x12000, scoped, tag = 'internal scratch']
  %s0 = inlined_call_operand.vmem [shape: bf16[32,32], index: 0, kind: input, shape index: {}]
  %s1 = inlined_call_operand.hbm [shape: bf16[32,96], index: 1, kind: input, shape index: {}]
  %s2 = inlined_call_operand.vmem [shape: f32[1,96], index: 2, kind: input, shape index: {}]
  %s3 = inlined_call_operand.vmem [shape: bf16[32,16], index: 3, kind: input, shape index: {}]
  %s4 = inlined_call_operand.vmem [shape: bf16[16,96], index: 4, kind: input, shape index: {}]
  %s5 = inlined_call_operand.hbm [shape: f32[32,96], index: 5, kind: output, shape index: {}]
  %s6 = sld [smem:[#allocation0]]
  $region34: #{tpu_custom_call.1} parent=0
    _
  %s8 = ssub.s32 1, %s6
  %s9 = scalar_select 0, %s8, %s6
  $region1: #{tpu_custom_call.1} parent=0
    #allocation2 [shape = 'u8[8192]{0}', space=vmem, size = 0x2000, scoped, tag = 'input window, operand 1, single buffered']
    #allocation3 [shape = 's32[1]{0}', space=sflag, size = 0x4, scoped, tag = 'scoped memory for tpu_custom_call.1']
    #allocation4 [shape = 's32[1]{0}', space=sflag, size = 0x4, scoped, tag = 'scoped memory for tpu_custom_call.1']
    #allocation5 [shape = 'u8[16384]{0}', space=vmem, size = 0x4000, scoped, tag = 'output window, operand 0, single buffered']
    %10 = vsyncpa [#allocation3], 0
    %11 = vsyncpa [#allocation4], 0
    // Predicated region
    $region2: #{tpu_custom_call.1} parent=1 // pred_check
      _
    $region3: #{tpu_custom_call.1} parent=1 // pred_check_branch
      %13 = sbr.rel (0) target = $region5
    $region4: #{tpu_custom_call.1} parent=1 // pred_region
      _
    $region5: #{tpu_custom_call.1} parent=1 // pred_fallthru
      _
    // Predicated region
    $region6: #{tpu_custom_call.1} parent=1 // pred_check
      _
    $region7: #{tpu_custom_call.1} parent=1 // pred_check_branch
      %15 = sbr.rel (0) target = $region9
    $region8: #{tpu_custom_call.1} parent=1 // pred_region
      %s17 = ssub.s32 256, 256
      %18 = vsyncadd [#allocation3], %s17
      %s19 = sshll.u32 [#allocation2], 4
      %s20 = int_to_ptr.vmem [resolvable:$true] %s19
      %25 = dma.hbm_to_vmem [thread:$0]  %s1, 256, %s20, [#allocation3], 64, 64, 4
    $region9: #{tpu_custom_call.1} parent=1 // pred_fallthru
      _
    // Predicated region
    $region10: #{tpu_custom_call.1} parent=1 // pred_check
      _
    $region11: #{tpu_custom_call.1} parent=1 // pred_check_branch
      %27 = sbr.rel (0) target = $region13
    $region12: #{tpu_custom_call.1} parent=1 // pred_region
      _
    $region13: #{tpu_custom_call.1} parent=1 // pred_fallthru
      _
    // Predicated region
    $region14: #{tpu_custom_call.1} parent=1 // pred_check
      _
    $region15: #{tpu_custom_call.1} parent=1 // pred_check_branch
      %29 = sbr.rel (0) target = $region17
    $region16: #{tpu_custom_call.1} parent=1 // pred_region
      _
    $region17: #{tpu_custom_call.1} parent=1 // pred_fallthru
      _
    // Predicated region
    $region18: #{tpu_custom_call.1} parent=1 // pred_check
      _
    $region19: #{tpu_custom_call.1} parent=1 // pred_check_branch
      %31 = sbr.rel (0) target = $region21
    $region20: #{tpu_custom_call.1} parent=1 // pred_region
      _
    $region21: #{tpu_custom_call.1} parent=1 // pred_fallthru
      _
    // Predicated region
    $region22: #{tpu_custom_call.1} parent=1 // pred_check
      _
    $region23: #{tpu_custom_call.1} parent=1 // pred_check_branch
      %33 = sbr.rel (0) target = $region25
    $region24: #{tpu_custom_call.1} parent=1 // pred_region
      %34 = dma.done [#allocation3], 256
    $region25: #{tpu_custom_call.1} parent=1 // pred_fallthru
      _
    %v36 = vld [vmem:[%s0] sm:$0xf]
    %v37 = vld [vmem:[%s0 + $0x4] sm:$0xf]
    %v38 = vld [vmem:[%s0 + $0x8] sm:$0xf]
    %v39 = vld [vmem:[%s0 + $0xc] sm:$0xf]
    %v40 = vld [vmem:[#allocation2] sm:$0xf]
    %v41 = vld [vmem:[#allocation2 + $0x4] sm:$0xf]
    %v42 = vld [vmem:[#allocation2 + $0x8] sm:$0xf]
    %v43 = vld [vmem:[#allocation2 + $0xc] sm:$0xf]
    %v44 = vld [vmem:[%s3] sm:$0xf]
    %v45 = vld [vmem:[%s3 + $0x4] sm:$0xf]
    %v46 = vld [vmem:[%s3 + $0x8] sm:$0xf]
    %v47 = vld [vmem:[%s3 + $0xc] sm:$0xf]
    %v52 = vunpack.c.l.b16 %v36
    %v53 = vunpack.c.l.b16 %v37
    %v54 = vunpack.c.l.b16 %v38
    %v55 = vunpack.c.l.b16 %v39
    %v56 = vpack.c.b16 %v53, %v52
    %v57 = vpack.c.b16 %v55, %v54
    %v62 = vunpack.c.l.b16 %v44
    %v63 = vunpack.c.l.b16 %v45
    %v64 = vunpack.c.l.b16 %v46
    %v65 = vunpack.c.l.b16 %v47
    %v66 = vpack.c.b16 %v63, %v62
    %v67 = vpack.c.b16 %v65, %v64
    %vm70 = vcmask 261120
    %v72 = vsel %vm70, %v56, 0
    %v75 = vsel %vm70, %v57, 0
    %77 = vmatprep.subr.bf16.mxu0 0
    %78 = vmatpush1.bf16.msra.mxu0 %v66
    %79 = vmatprep.subr.bf16.mxu0 0
    %80 = vmatpush1.bf16.msra.mxu0 %v67
    %81 = vmatprep.subr.bf16.mxu0 0
    %82 = vmatpush1.bf16.msra.mxu0 0
    %83 = vmatprep.subr.bf16.mxu0 0
    %84 = vmatpush1.bf16.msra.mxu0 0
    %85 = vmatprep.subr.bf16.mxu0 0
    %86 = vmatpush1.bf16.msra.mxu0 0
    %87 = vmatprep.subr.bf16.mxu0 0
    %88 = vmatpush1.bf16.msra.mxu0 0
    %89 = vmatprep.subr.bf16.mxu0 0
    %90 = vmatpush1.bf16.msra.mxu0 0
    %91 = vmatprep.subr.bf16.mxu0 0
    %92 = vmatpush1.bf16.msra.mxu0 0
    %93 = vmatprep.subr.bf16.mxu0 0
    %94 = vmatpush1.bf16.msra.mxu0 0
    %95 = vmatprep.subr.bf16.mxu0 0
    %96 = vmatpush1.bf16.msra.mxu0 0
    %97 = vmatprep.subr.bf16.mxu0 0
    %98 = vmatpush1.bf16.msra.mxu0 0
    %99 = vmatprep.subr.bf16.mxu0 0
    %100 = vmatpush1.bf16.msra.mxu0 0
    %101 = vmatprep.subr.bf16.mxu0 0
    %102 = vmatpush1.bf16.msra.mxu0 0
    %103 = vmatprep.subr.bf16.mxu0 0
    %104 = vmatpush1.bf16.msra.mxu0 0
    %105 = vmatprep.subr.bf16.mxu0 0
    %106 = vmatpush1.bf16.msra.mxu0 0
    %107 = vmatprep.subr.bf16.mxu0 0
    %108 = vmatpush1.bf16.msra.mxu0 0
    %109 = vmatprep.mubr.bf16.mxu0 0
    %110 = vmatmul.mubr.bf16.gmra.mrb[0].mxu0 %v72
    %v111 = vpop.f32.mrb[0].mxu0
    %v112 = vadd.f32 0.0, %v111
    %v113 = vpop.f32.mrb[0].mxu0
    %v114 = vpop.f32.mrb[0].mxu0
    %v115 = vadd.f32 0.0, %v114
    %v116 = vpop.f32.mrb[0].mxu0
    %117 = vmatprep.mubr.bf16.mxu0 0
    %118 = vmatmul.mubr.bf16.gmra.mrb[0].mxu0 %v75
    %v119 = vpop.f32.mrb[0].mxu0
    %v120 = vadd.f32 0.0, %v119
    %v121 = vpop.f32.mrb[0].mxu0
    %v122 = vpop.f32.mrb[0].mxu0
    %v123 = vadd.f32 0.0, %v122
    %v124 = vpop.f32.mrb[0].mxu0
    %125 = vdwg.mxu0
    %v126 = vpack.c.bf16 %v115, %v112
    %v127 = vpack.c.bf16 %v123, %v120
    %v128 = vld [vmem:[%s4] sm:$0xf]
    %v129 = vld [vmem:[%s4 + $0x4] sm:$0xf]
    %v132 = vunpack.c.l.b16 %v128
    %v133 = vunpack.c.l.b16 %v129
    %v134 = vpack.c.b16 %v133, %v132
    %vm136 = vcmask 130048
    %v138 = vsel %vm136, %v126, 0
    %v141 = vsel %vm136, %v127, 0
    %143 = vmatprep.subr.bf16.mxu0 0
    %144 = vmatpush1.bf16.msra.mxu0 %v134
    %145 = vmatprep.subr.bf16.mxu0 0
    %146 = vmatpush1.bf16.msra.mxu0 0
    %147 = vmatprep.subr.bf16.mxu0 0
    %148 = vmatpush1.bf16.msra.mxu0 0
    %149 = vmatprep.subr.bf16.mxu0 0
    %150 = vmatpush1.bf16.msra.mxu0 0
    %151 = vmatprep.subr.bf16.mxu0 0
    %152 = vmatpush1.bf16.msra.mxu0 0
    %153 = vmatprep.subr.bf16.mxu0 0
    %154 = vmatpush1.bf16.msra.mxu0 0
    %155 = vmatprep.subr.bf16.mxu0 0
    %156 = vmatpush1.bf16.msra.mxu0 0
    %157 = vmatprep.subr.bf16.mxu0 0
    %158 = vmatpush1.bf16.msra.mxu0 0
    %159 = vmatprep.subr.bf16.mxu0 0
    %160 = vmatpush1.bf16.msra.mxu0 0
    %161 = vmatprep.subr.bf16.mxu0 0
    %162 = vmatpush1.bf16.msra.mxu0 0
    %163 = vmatprep.subr.bf16.mxu0 0
    %164 = vmatpush1.bf16.msra.mxu0 0
    %165 = vmatprep.subr.bf16.mxu0 0
    %166 = vmatpush1.bf16.msra.mxu0 0
    %167 = vmatprep.subr.bf16.mxu0 0
    %168 = vmatpush1.bf16.msra.mxu0 0
    %169 = vmatprep.subr.bf16.mxu0 0
    %170 = vmatpush1.bf16.msra.mxu0 0
    %171 = vmatprep.subr.bf16.mxu0 0
    %172 = vmatpush1.bf16.msra.mxu0 0
    %173 = vmatprep.subr.bf16.mxu0 0
    %174 = vmatpush1.bf16.msra.mxu0 0
    %175 = vmatprep.mubr.bf16.mxu0 0
    %176 = vmatmul.mubr.bf16.gmra.mrb[0].mxu0 %v138
    %v177 = vpop.f32.mrb[0].mxu0
    %v178 = vadd.f32 0.0, %v177
    %v179 = vpop.f32.mrb[0].mxu0
    %v180 = vpop.f32.mrb[0].mxu0
    %v181 = vadd.f32 0.0, %v180
    %v182 = vpop.f32.mrb[0].mxu0
    %183 = vmatprep.mubr.bf16.mxu0 0
    %184 = vmatmul.mubr.bf16.gmra.mrb[0].mxu0 %v141
    %v185 = vpop.f32.mrb[0].mxu0
    %v186 = vadd.f32 0.0, %v185
    %v187 = vpop.f32.mrb[0].mxu0
    %v188 = vpop.f32.mrb[0].mxu0
    %v189 = vadd.f32 0.0, %v188
    %v190 = vpop.f32.mrb[0].mxu0
    %191 = vdwg.mxu0
    %v192 = vld [vmem:[%s2] sm:$0x1]
    %v194 = vlaneseq
    %v195 = vshrl.u32 %v194, 7
    %v196 = vsub.s32 0, %v195
    %v197 = vrot.slane %v192, %v196
    %v203 = vunpack.c.l.b16 %v40
    %v204 = vunpack.c.l.b16 %v41
    %v205 = vunpack.c.l.b16 %v42
    %v206 = vunpack.c.l.b16 %v43
    %v207 = vpack.c.b16 %v204, %v203
    %v208 = vpack.c.b16 %v206, %v205
    %211 = vmatprep.subr.bf16.mxu0 0
    %212 = vmatpush1.bf16.msra.mxu0 %v207
    %213 = vmatprep.subr.bf16.mxu0 0
    %214 = vmatpush1.bf16.msra.mxu0 %v208
    %215 = vmatprep.subr.bf16.mxu0 0
    %216 = vmatpush1.bf16.msra.mxu0 0
    %217 = vmatprep.subr.bf16.mxu0 0
    %218 = vmatpush1.bf16.msra.mxu0 0
    %219 = vmatprep.subr.bf16.mxu0 0
    %220 = vmatpush1.bf16.msra.mxu0 0
    %221 = vmatprep.subr.bf16.mxu0 0
    %222 = vmatpush1.bf16.msra.mxu0 0
    %223 = vmatprep.subr.bf16.mxu0 0
    %224 = vmatpush1.bf16.msra.mxu0 0
    %225 = vmatprep.subr.bf16.mxu0 0
    %226 = vmatpush1.bf16.msra.mxu0 0
    %227 = vmatprep.subr.bf16.mxu0 0
    %228 = vmatpush1.bf16.msra.mxu0 0
    %229 = vmatprep.subr.bf16.mxu0 0
    %230 = vmatpush1.bf16.msra.mxu0 0
    %231 = vmatprep.subr.bf16.mxu0 0
    %232 = vmatpush1.bf16.msra.mxu0 0
    %233 = vmatprep.subr.bf16.mxu0 0
    %234 = vmatpush1.bf16.msra.mxu0 0
    %235 = vmatprep.subr.bf16.mxu0 0
    %236 = vmatpush1.bf16.msra.mxu0 0
    %237 = vmatprep.subr.bf16.mxu0 0
    %238 = vmatpush1.bf16.msra.mxu0 0
    %239 = vmatprep.subr.bf16.mxu0 0
    %240 = vmatpush1.bf16.msra.mxu0 0
    %241 = vmatprep.subr.bf16.mxu0 0
    %242 = vmatpush1.bf16.msra.mxu0 0
    %243 = vmatprep.mubr.bf16.mxu0 0
    %244 = vmatmul.mubr.bf16.gmra.mrb[0].mxu0 %v72
    %v245 = vpop.f32.mrb[0].mxu0
    %v246 = vadd.f32 %v197, %v245
    %v247 = vpop.f32.mrb[0].mxu0
    %v248 = vpop.f32.mrb[0].mxu0
    %v249 = vadd.f32 %v197, %v248
    %v250 = vpop.f32.mrb[0].mxu0
    %251 = vmatprep.mubr.bf16.mxu0 0
    %252 = vmatmul.mubr.bf16.gmra.mrb[0].mxu0 %v75
    %v253 = vpop.f32.mrb[0].mxu0
    %v254 = vadd.f32 %v197, %v253
    %v255 = vpop.f32.mrb[0].mxu0
    %v256 = vpop.f32.mrb[0].mxu0
    %v257 = vadd.f32 %v197, %v256
    %v258 = vpop.f32.mrb[0].mxu0
    %259 = vdwg.mxu0
    %v260 = vadd.f32 %v246, %v178
    %v261 = vadd.f32 %v249, %v181
    %v262 = vadd.f32 %v254, %v186
    %v263 = vadd.f32 %v257, %v189
    %vm264 = vcmask 785408
    %265 = vst.msk [vmem:[#allocation5] sm:$0xff] %vm264, %v260
    %266 = vst.msk [vmem:[#allocation5 + $0x8] sm:$0xff] %vm264, %v261
    %267 = vst.msk [vmem:[#allocation5 + $0x10] sm:$0xff] %vm264, %v262
    %268 = vst.msk [vmem:[#allocation5 + $0x18] sm:$0xff] %vm264, %v263
    // Predicated region
    $region26: #{tpu_custom_call.1} parent=1 // pred_check
      _
    $region27: #{tpu_custom_call.1} parent=1 // pred_check_branch
      %270 = sbr.rel (0) target = $region29
    $region28: #{tpu_custom_call.1} parent=1 // pred_region
      %s272 = ssub.s32 512, 512
      %273 = vsyncadd [#allocation4], %s272
      %s274 = sshll.u32 [#allocation5], 4
      %s275 = int_to_ptr.vmem [resolvable:$true] %s274
      %280 = dma.vmem_to_hbm [thread:$0]  %s275, 512, %s5, [#allocation4], 128, 128, 8
    $region29: #{tpu_custom_call.1} parent=1 // pred_fallthru
      _
    // Predicated region
    $region30: #{tpu_custom_call.1} parent=1 // pred_check
      _
    $region31: #{tpu_custom_call.1} parent=1 // pred_check_branch
      %282 = sbr.rel (0) target = $region33
    $region32: #{tpu_custom_call.1} parent=1 // pred_region
      %283 = dma.done [#allocation4], 512
    $region33: #{tpu_custom_call.1} parent=1 // pred_fallthru
      _
    %284 = vsyncpa [#allocation3], 1
    %285 = vsyncpa [#allocation4], 1

</llo_original>
